<compile_context>
chip_gen: v5e
topology: v5e:2x2
jax: 0.10.0
libtpu: 0.0.40
codegen_flags: <defaults>
</compile_context>

<pallas_src>
import math

import jax
import jax.numpy as jnp
from jax.experimental import pallas as pl
from jax.experimental.pallas import tpu as pltpu


def _fused_linear_sub_relu_kernel(w_ref, x1_ref, x2_ref, o_ref):
    # w_ref : (N, K)                VMEM-resident (constant index_map)
    # x1_ref: (K, TILE_M)           feature-major: features in sublanes, M in lanes
    # x2_ref: (N, TILE_M) or (N, 1) full tile OR resident bias-like broadcast
    # o_ref : (N, TILE_M)
    w = w_ref[...].astype(jnp.float32)                     # tiny (5, 3)
    acc = x2_ref[...].astype(jnp.float32)                  # (N, TILE_M) or (N, 1)
    for k in range(x1_ref.shape[0]):                       # K = 3, unrolled at trace
        # (N, 1) weight column * (1, TILE_M) activation row -> (N, TILE_M) on VPU.
        # Strictly per-lane math, so garbage in the padded lanes of a partial
        # last block stays confined to masked output lanes.
        acc = acc - w[:, k:k + 1] * x1_ref[k:k + 1, :].astype(jnp.float32)
    o_ref[...] = jnp.maximum(acc, 0.0).astype(o_ref.dtype)


def fused_linear_sub_relu_feature_major(x1_fm, x2_fm, weight, *, tile_m=32768):
    """relu(x2 - weight @ x1) in feature-major layout (preferred, no layout ops).

    x1_fm : (K, M)            activations, features in sublanes, rows in lanes
    x2_fm : (N, M) or (N, 1)  full residual, or bias-like broadcast (kept resident)
    weight: (N, K)            PyTorch Linear convention
    returns (N, M)
    """
    n, k = weight.shape
    if x1_fm.ndim != 2 or x1_fm.shape[0] != k:
        raise ValueError(f"x1_fm must be (K={k}, M), got {x1_fm.shape}")
    m = x1_fm.shape[1]
    if x2_fm.ndim != 2 or x2_fm.shape[0] != n or x2_fm.shape[1] not in (1, m):
        raise ValueError(f"x2_fm must be ({n}, {m}) or ({n}, 1), got {x2_fm.shape}")
    x2_resident = (x2_fm.shape[1] == 1) and (m != 1)

    # dtype follows the ORIGINAL input dtypes (bf16 in -> bf16 out).
    out_dtype = jnp.result_type(x1_fm.dtype, x2_fm.dtype, weight.dtype)

    # Tile M along lanes.  Small M -> single full-extent block (exempt from the
    # 128-divisibility rule); large M -> 32768-lane tiles with a cdiv grid
    # (Pallas masks the partial last block).
    tm = tile_m if m >= tile_m else max(m, 1)
    grid = (pl.cdiv(m, tm),)

    if x2_resident:
        # Bias-like x2: constant block index -> fetched once, broadcast on VPU.
        x2_spec = pl.BlockSpec((n, 1), lambda i: (0, 0))
    else:
        x2_spec = pl.BlockSpec((n, tm), lambda i: (0, i))

    return pl.pallas_call(
        _fused_linear_sub_relu_kernel,
        out_shape=jax.ShapeDtypeStruct((n, m), out_dtype),
        grid=grid,
        in_specs=[
            # Tiny (5, 3) weight: constant block index -> stays VMEM resident.
            pl.BlockSpec((n, k), lambda i: (0, 0)),
            pl.BlockSpec((k, tm), lambda i: (0, i)),
            x2_spec,
        ],
        out_specs=pl.BlockSpec((n, tm), lambda i: (0, i)),
        compiler_params=pltpu.CompilerParams(
            # Independent M tiles: lets v7x shard the grid across both
            # TensorCores; harmless on single-core v5e/v6e.  If a v7x profile
            # shows one core idle, switch to pltpu.CORE_PARALLEL.
            dimension_semantics=("parallel",),
        ),
    )(weight, x1_fm, x2_fm)


def fused_linear_sub_relu(x1, x2, weight, *, tile_m=32768):
    """relu(x2 - x1 @ weight.T) with features on the LAST axis (torch convention).

    This adapter transposes x1 and the output between row-major (features-last)
    and the kernel's feature-major layout; each is one HBM pass.  If the
    surrounding model can keep activations feature-major end-to-end, call
    fused_linear_sub_relu_feature_major directly and skip them.
    """
    n, k = weight.shape
    if x1.shape[-1] != k:
        raise ValueError(f"x1 last dim {x1.shape[-1]} != in_features {k}")
    lead = x1.shape[:-1]
    m = math.prod(lead) if lead else 1
    full_x2_shape = lead + (n,)
    # Explicitly assert broadcast compatibility (was only failing implicitly before).
    if jnp.broadcast_shapes(x2.shape, full_x2_shape) != full_x2_shape:
        raise ValueError(f"x2 shape {x2.shape} does not broadcast to {full_x2_shape}")

    x1_fm = x1.reshape(m, k).T                             # (K, M): adapter pass

    if x2.shape == full_x2_shape:
        x2_fm = x2.reshape(m, n).T                         # (N, M): adapter pass
    elif math.prod(x2.shape) == n:
        # Bias-like broadcast: never materialized in HBM; kept (N, 1) resident
        # in VMEM and broadcast on the VPU inside the kernel.
        x2_fm = x2.reshape(n, 1)                           # free reshape
    else:
        # Rare partially-broadcast case: fall back to a materialized broadcast.
        x2_fm = jnp.broadcast_to(x2, full_x2_shape).reshape(m, n).T

    out_fm = fused_linear_sub_relu_feature_major(x1_fm, x2_fm, weight,
                                                 tile_m=tile_m)
    return out_fm.T.reshape(full_x2_shape)                 # adapter pass


class Model:
    """JAX/Pallas mirror of the PyTorch module (Linear(3, 5, bias=False))."""

    IN_FEATURES = 3
    OUT_FEATURES = 5

    def __init__(self, key):
        bound = 1.0 / math.sqrt(self.IN_FEATURES)
        self.weight = jax.random.uniform(
            key, (self.OUT_FEATURES, self.IN_FEATURES),
            minval=-bound, maxval=bound, dtype=jnp.float32)

    def __call__(self, x1, x2):
        # Torch-convention interface (features on the last axis).
        return fused_linear_sub_relu(x1, x2, self.weight)


if __name__ == "__main__":
    key = jax.random.PRNGKey(0)
    k_w, k_x1, k_x2, k_x1b, k_x2b = jax.random.split(key, 5)

    model = Model(k_w)
    W = model.weight

    # (1) Torch-convention path: x1 (2, 8, 3), x2 (2, 8, 5).
    x1 = jax.random.normal(k_x1, (2, 8, 3), dtype=jnp.float32)
    x2 = jax.random.normal(k_x2, (2, 8, 5), dtype=jnp.float32)
    out = jax.block_until_ready(model(x1, x2))
    ref = jnp.maximum(x2 - jnp.einsum("bsk,nk->bsn", x1, W), 0.0)
    assert out.shape == (2, 8, 5)
    assert jnp.allclose(out, ref, atol=1e-5, rtol=1e-5)

    # (2) Preferred feature-major path: zero wrapper layout passes, multi-tile
    #     grid with a partial last block, and a bias-like resident x2 (N, 1).
    x1_fm = jax.random.normal(k_x1b, (3, 300), dtype=jnp.float32)
    x2_vec = jax.random.normal(k_x2b, (5,), dtype=jnp.float32)
    out_fm = jax.block_until_ready(
        fused_linear_sub_relu_feature_major(x1_fm, x2_vec.reshape(5, 1), W,
                                            tile_m=128))
    ref_fm = jnp.maximum(x2_vec.reshape(5, 1) - W @ x1_fm, 0.0)
    assert out_fm.shape == (5, 300)
    assert jnp.allclose(out_fm, ref_fm, atol=1e-5, rtol=1e-5)

    # (3) bf16 I/O end-to-end (no forced f32 round-trip in HBM); accumulate f32.
    out_bf = jax.block_until_ready(
        fused_linear_sub_relu(x1.astype(jnp.bfloat16), x2.astype(jnp.bfloat16),
                              W.astype(jnp.bfloat16)))
    assert out_bf.dtype == jnp.bfloat16
    assert jnp.allclose(out_bf.astype(jnp.float32), ref, atol=1e-1, rtol=5e-2)

    print("KERNEL_OK")
</pallas_src>

<mosaic_0001>
module attributes {stable_mosaic.version = 11 : i64} {
  func.func @_fused_linear_sub_relu_kernel(%arg0: i32, %arg1: memref<5x3xf32, #tpu.memory_space<vmem>>, %arg2: memref<3x16xf32, #tpu.memory_space<vmem>>, %arg3: memref<5x16xf32, #tpu.memory_space<vmem>>, %arg4: memref<5x16xf32, #tpu.memory_space<vmem>>) attributes {dimension_semantics = [#tpu.dimension_semantics<parallel>], iteration_bounds = array<i64: 1>, scalar_prefetch = 0 : i64, scratch_operands = 0 : i64, tpu.core_type = #tpu.core_type<tc>, window_params = [{pipeline_mode = #tpu.pipeline_mode<synchronous>, transform_indices = @transform_0, window_bounds = array<i64: 5, 3>}, {transform_indices = @transform_1, window_bounds = array<i64: 3, 16>}, {transform_indices = @transform_2, window_bounds = array<i64: 5, 16>}, {transform_indices = @transform_3, window_bounds = array<i64: 5, 16>}]} {
    %c0 = arith.constant 0 : index
    %c0_0 = arith.constant 0 : index
    %0 = vector.load %arg1[%c0, %c0_0] : memref<5x3xf32, #tpu.memory_space<vmem>>, vector<5x3xf32>
    %c0_1 = arith.constant 0 : index
    %c0_2 = arith.constant 0 : index
    %1 = vector.load %arg3[%c0_1, %c0_2] : memref<5x16xf32, #tpu.memory_space<vmem>>, vector<5x16xf32>
    %2 = vector.extract_strided_slice %0 {offsets = [0, 0], sizes = [5, 1], strides = [1, 1]} : vector<5x3xf32> to vector<5x1xf32>
    %c0_3 = arith.constant 0 : index
    %c0_4 = arith.constant 0 : index
    %3 = vector.load %arg2[%c0_3, %c0_4] : memref<3x16xf32, #tpu.memory_space<vmem>>, vector<1x16xf32>
    %4 = vector.broadcast %2 : vector<5x1xf32> to vector<5x16xf32>
    %5 = vector.broadcast %3 : vector<1x16xf32> to vector<5x16xf32>
    %6 = arith.mulf %4, %5 : vector<5x16xf32>
    %7 = arith.subf %1, %6 : vector<5x16xf32>
    %8 = vector.extract_strided_slice %0 {offsets = [0, 1], sizes = [5, 1], strides = [1, 1]} : vector<5x3xf32> to vector<5x1xf32>
    %c1 = arith.constant 1 : index
    %c0_5 = arith.constant 0 : index
    %9 = vector.load %arg2[%c1, %c0_5] : memref<3x16xf32, #tpu.memory_space<vmem>>, vector<1x16xf32>
    %10 = vector.broadcast %8 : vector<5x1xf32> to vector<5x16xf32>
    %11 = vector.broadcast %9 : vector<1x16xf32> to vector<5x16xf32>
    %12 = arith.mulf %10, %11 : vector<5x16xf32>
    %13 = arith.subf %7, %12 : vector<5x16xf32>
    %14 = vector.extract_strided_slice %0 {offsets = [0, 2], sizes = [5, 1], strides = [1, 1]} : vector<5x3xf32> to vector<5x1xf32>
    %c2 = arith.constant 2 : index
    %c0_6 = arith.constant 0 : index
    %15 = vector.load %arg2[%c2, %c0_6] : memref<3x16xf32, #tpu.memory_space<vmem>>, vector<1x16xf32>
    %16 = vector.broadcast %14 : vector<5x1xf32> to vector<5x16xf32>
    %17 = vector.broadcast %15 : vector<1x16xf32> to vector<5x16xf32>
    %18 = arith.mulf %16, %17 : vector<5x16xf32>
    %19 = arith.subf %13, %18 : vector<5x16xf32>
    %cst = arith.constant 0.000000e+00 : f32
    %20 = vector.broadcast %cst : f32 to vector<5x16xf32>
    %21 = arith.maximumf %19, %20 : vector<5x16xf32>
    %c0_7 = arith.constant 0 : index
    %c0_8 = arith.constant 0 : index
    %22 = vector.load %arg4[%c0_7, %c0_8] : memref<5x16xf32, #tpu.memory_space<vmem>>, vector<5x16xf32>
    tpu.vector_store %arg4[%c0_7, %c0_8], %21 {strides = array<i32>} : memref<5x16xf32, #tpu.memory_space<vmem>>, vector<5x16xf32>,
    return
  }
  func.func @transform_0(%arg0: i32) -> (i32, i32) {
    %c0_i32 = arith.constant 0 : i32
    %c0_i32_0 = arith.constant 0 : i32
    %c0_i32_1 = arith.constant 0 : i32
    return %c0_i32, %c0_i32_0 : i32, i32
  }
  func.func @transform_1(%arg0: i32) -> (i32, i32) {
    %c0_i32 = arith.constant 0 : i32
    %c0_i32_0 = arith.constant 0 : i32
    return %c0_i32, %arg0 : i32, i32
  }
  func.func @transform_2(%arg0: i32) -> (i32, i32) {
    %c0_i32 = arith.constant 0 : i32
    %c0_i32_0 = arith.constant 0 : i32
    return %c0_i32, %arg0 : i32, i32
  }
  func.func @transform_3(%arg0: i32) -> (i32, i32) {
    %c0_i32 = arith.constant 0 : i32
    %c0_i32_0 = arith.constant 0 : i32
    return %c0_i32, %arg0 : i32, i32
  }
}

</mosaic_0001>

<llo_original>
// kernel: tpu_custom_call.1
$region0: #{tpu_custom_call.1}
  #allocation0 [shape = 'u32[]', space=smem, size = 0x4, offset = 0x4, fixed_abs, tag = 'smem constant byte address 0x4 - core index']
  #allocation1 [shape = 'u32[72,128]{1,0:T(1,128)}', space=vmem, size = 0x9000, scoped, tag = 'internal scratch']
  %s0 = inlined_call_operand.vmem [shape: f32[5,3], index: 0, kind: input, shape index: {}]
  %s1 = inlined_call_operand.vmem [shape: f32[3,16], index: 1, kind: input, shape index: {}]
  %s2 = inlined_call_operand.vmem [shape: f32[5,16], index: 2, kind: input, shape index: {}]
  %s3 = inlined_call_operand.hbm [shape: f32[5,16], index: 3, kind: output, shape index: {}]
  %s4 = sld [smem:[#allocation0]]
  $region22: #{tpu_custom_call.1} parent=0
    _
  %s6 = ssub.s32 1, %s4
  %s7 = scalar_select 0, %s6, %s4
  $region1: #{tpu_custom_call.1} parent=0
    #allocation2 [shape = 'u8[4096]{0}', space=vmem, size = 0x1000, scoped, tag = 'output window, operand 0, single buffered']
    #allocation3 [shape = 's32[1]{0}', space=sflag, size = 0x4, scoped, tag = 'scoped memory for tpu_custom_call.1']
    %8 = vsyncpa [#allocation3], 0
    // Predicated region
    $region2: #{tpu_custom_call.1} parent=1 // pred_check
      _
    $region3: #{tpu_custom_call.1} parent=1 // pred_check_branch
      %10 = sbr.rel (0) target = $region5
    $region4: #{tpu_custom_call.1} parent=1 // pred_region
      _
    $region5: #{tpu_custom_call.1} parent=1 // pred_fallthru
      _
    // Predicated region
    $region6: #{tpu_custom_call.1} parent=1 // pred_check
      _
    $region7: #{tpu_custom_call.1} parent=1 // pred_check_branch
      %12 = sbr.rel (0) target = $region9
    $region8: #{tpu_custom_call.1} parent=1 // pred_region
      _
    $region9: #{tpu_custom_call.1} parent=1 // pred_fallthru
      _
    // Predicated region
    $region10: #{tpu_custom_call.1} parent=1 // pred_check
      _
    $region11: #{tpu_custom_call.1} parent=1 // pred_check_branch
      %14 = sbr.rel (0) target = $region13
    $region12: #{tpu_custom_call.1} parent=1 // pred_region
      _
    $region13: #{tpu_custom_call.1} parent=1 // pred_fallthru
      _
    %v15 = vld [vmem:[%s0] sm:$0x1f]
    %v16 = vld [vmem:[%s2] sm:$0x1f]
    %v17 = vld [vmem:[%s1] sm:$0x1]
    %19 = vset.pattern.permute.xlu0 0
    %20 = vperm.xlu0 %19, %v15
    %v21 = vpop.permute.xlu0 %20
    %v23 = vperm.slane %v17, 0
    %v24 = vmul.f32 %v21, %v23
    %v25 = vsub.f32 %v16, %v24
    %v26 = vld [vmem:[%s1 + $0x1] sm:$0x1]
    %27 = vset.pattern.permute.xlu0 1
    %28 = vperm.xlu0 %27, %v15
    %v29 = vpop.permute.xlu0 %28
    %v31 = vperm.slane %v26, 0
    %v32 = vmul.f32 %v29, %v31
    %v33 = vsub.f32 %v25, %v32
    %v34 = vld [vmem:[%s1 + $0x2] sm:$0x1]
    %35 = vset.pattern.permute.xlu0 2
    %36 = vperm.xlu0 %35, %v15
    %v37 = vpop.permute.xlu0 %36
    %v39 = vperm.slane %v34, 0
    %v40 = vmul.f32 %v37, %v39
    %v41 = vsub.f32 %v33, %v40
    %v42 = vmax.f32 %v41, 0.0
    %vm43 = vcmask 126976
    %44 = vst.msk [vmem:[#allocation2] sm:$0x1f] %vm43, %v42
    // Predicated region
    $region14: #{tpu_custom_call.1} parent=1 // pred_check
      _
    $region15: #{tpu_custom_call.1} parent=1 // pred_check_branch
      %46 = sbr.rel (0) target = $region17
    $region16: #{tpu_custom_call.1} parent=1 // pred_region
      %48 = vsyncadd [#allocation3], 0
      %s50 = sshll.u32 [#allocation2], 4
      %s51 = int_to_ptr.vmem [resolvable:$true] %s50
      %s52 = sshll.u32 %s3, 4
      %s53 = int_to_ptr.hbm [resolvable:$true] %s52
      %55 = dma.vmem_to_hbm [thread:$0]  %s51, 128, %s53, [#allocation3]
    $region17: #{tpu_custom_call.1} parent=1 // pred_fallthru
      _
    // Predicated region
    $region18: #{tpu_custom_call.1} parent=1 // pred_check
      _
    $region19: #{tpu_custom_call.1} parent=1 // pred_check_branch
      %57 = sbr.rel (0) target = $region21
    $region20: #{tpu_custom_call.1} parent=1 // pred_region
      %59 = dma.done [#allocation3], 128
    $region21: #{tpu_custom_call.1} parent=1 // pred_fallthru
      _
    %60 = vsyncpa [#allocation3], 1

</llo_original>
